<compile_context>
chip_gen: v6e
topology: v6e:2x2x1
jax: 0.10.0
libtpu: 0.0.40
codegen_flags: <defaults>
</compile_context>

<pallas_src>
import jax
import jax.numpy as jnp
from jax.experimental import pallas as pl
from jax.experimental.pallas import tpu as pltpu

K_IN = 784           # 28*28, streamed at native width (no padding)
H1 = 256
H2 = 256
H3 = 64
N_CLASSES = 10
N_OUT = 128          # 10 zero-padded to 128 (lane-dense output slab)


def mlp_kernel(x_ref,
               w1_ref, b1_ref,
               w2_ref, b2_ref,
               w3_ref, b3_ref,
               w4_ref, b4_ref,
               o_ref):
    """Fused forward for one batch tile: 4 matmuls + ReLU + masked log_softmax.

    x_ref:  (TM, 784) f32 tile (streamed per grid step; cast to bf16 here)
    wN_ref: bf16 weights (in, out), resident in VMEM across the whole grid
    bN_ref: (1, out) f32 biases
    o_ref:  (TM, 128) bf16 log-probs slab (cols >= 10 are padding)
    """
    x = x_ref[...].astype(jnp.bfloat16)                              # in-kernel cast

    a1 = jnp.dot(x, w1_ref[...], preferred_element_type=jnp.float32) + b1_ref[...]
    h1 = jnp.maximum(a1, 0.0).astype(jnp.bfloat16)

    a2 = jnp.dot(h1, w2_ref[...], preferred_element_type=jnp.float32) + b2_ref[...]
    h2 = jnp.maximum(a2, 0.0).astype(jnp.bfloat16)

    a3 = jnp.dot(h2, w3_ref[...], preferred_element_type=jnp.float32) + b3_ref[...]
    h3 = jnp.maximum(a3, 0.0).astype(jnp.bfloat16)

    logits = jnp.dot(h3, w4_ref[...], preferred_element_type=jnp.float32) + b4_ref[...]

    # Mask the 118 padded class columns so they don't perturb log_softmax.
    col = jax.lax.broadcasted_iota(jnp.int32, logits.shape, 1)
    logits = jnp.where(col < N_CLASSES, logits, -1e30)

    # Row-wise log_softmax in f32.
    m = jnp.max(logits, axis=-1, keepdims=True)
    shifted = logits - m
    lse = jnp.log(jnp.sum(jnp.exp(shifted), axis=-1, keepdims=True))
    o_ref[...] = (shifted - lse).astype(o_ref.dtype)


def _round_up(n, m):
    return ((n + m - 1) // m) * m


def _choose_tile_m(batch):
    """Batch-tile size.

    Tiny batches: a single tile rounded to a multiple of 16 (bf16 sublanes).
    Otherwise split into >= 2 grid steps so v7x megacore shards the batch and
    the x DMA overlaps compute; cap at 1024 (v6e per-step-overhead sweet spot,
    ~12 MiB total VMEM — comfortable on v7x's 64 MiB per TC).
    """
    if batch <= 32:
        return _round_up(max(batch, 1), 16)
    return min(_round_up((batch + 1) // 2, 16), 1024)


def _init_linear(key, in_features, out_features):
    """PyTorch nn.Linear default init: U[-k, k], k = 1/sqrt(fan_in)."""
    kw, kb = jax.random.split(key)
    bound = 1.0 / jnp.sqrt(jnp.float32(in_features))
    w = jax.random.uniform(kw, (in_features, out_features), jnp.float32, -bound, bound)
    b = jax.random.uniform(kb, (1, out_features), jnp.float32, -bound, bound)
    return w, b


def init_mlp_params(key):
    """Kernel-layout params: bf16 weights, f32 biases; only layer-4 N padded."""
    k1, k2, k3, k4 = jax.random.split(key, 4)
    w1, b1 = _init_linear(k1, K_IN, H1)
    w2, b2 = _init_linear(k2, H1, H2)
    w3, b3 = _init_linear(k3, H2, H3)
    w4, b4 = _init_linear(k4, H3, N_CLASSES)

    # Zero-pad only the output columns of layer 4 (lane-dense output slab).
    w4 = jnp.pad(w4, ((0, 0), (0, N_OUT - N_CLASSES)))
    b4 = jnp.pad(b4, ((0, 0), (0, N_OUT - N_CLASSES)))

    return (w1.astype(jnp.bfloat16), b1,
            w2.astype(jnp.bfloat16), b2,
            w3.astype(jnp.bfloat16), b3,
            w4.astype(jnp.bfloat16), b4)


@jax.jit
def mlp_forward(x_nchw, params):
    """torch.flatten(x, 1) -> fc1..fc4 -> log_softmax, via the Pallas kernel."""
    w1, b1, w2, b2, w3, b3, w4, b4 = params
    B = x_nchw.shape[0]

    # Free reshape NCHW -> (B, 784); stays f32, no cast, no K padding.
    x = x_nchw.reshape(B, K_IN)

    TM = _choose_tile_m(B)
    B_pad = _round_up(B, TM)
    if B_pad != B:
        x = jnp.pad(x, ((0, B_pad - B), (0, 0)))
    grid = (B_pad // TM,)

    resident = lambda i: (0, 0)   # weights/biases never re-DMA'd

    def wspec(shape):
        # Constant index_map + single buffer: fetched once, stays resident.
        return pl.BlockSpec(shape, resident, pipeline_mode=pl.Buffered(1))

    in_specs = [
        pl.BlockSpec((TM, K_IN), lambda i: (i, 0)),          # f32 x tile, streamed
        wspec((K_IN, H1)), wspec((1, H1)),
        wspec((H1, H2)), wspec((1, H2)),
        wspec((H2, H3)), wspec((1, H3)),
        wspec((H3, N_OUT)), wspec((1, N_OUT)),
    ]
    out_spec = pl.BlockSpec((TM, N_OUT), lambda i: (i, 0))

    weight_elems = K_IN * H1 + H1 * H2 + H2 * H3 + H3 * N_OUT
    flops = 2 * B_pad * weight_elems
    bytes_accessed = (B_pad * K_IN * 4                  # f32 x stream
                      + B_pad * N_OUT * 2               # bf16 output slab
                      + weight_elems * 2                # bf16 weights
                      + (H1 + H2 + H3 + N_OUT) * 4)     # f32 biases

    out = pl.pallas_call(
        mlp_kernel,
        out_shape=jax.ShapeDtypeStruct((B_pad, N_OUT), jnp.bfloat16),
        grid=grid,
        in_specs=in_specs,
        out_specs=out_spec,
        compiler_params=pltpu.CompilerParams(
            dimension_semantics=("parallel",),           # megacore on v7x
            vmem_limit_bytes=48 * 1024 * 1024),          # < v7x 64 MiB phys
        cost_estimate=pl.CostEstimate(
            flops=flops,
            transcendentals=B_pad * N_OUT,
            bytes_accessed=bytes_accessed),
    )(x, w1, b1, w2, b2, w3, b3, w4, b4)

    # Tiny (B, 10) slice; cast back to f32 for interface fidelity.
    return out[:B, :N_CLASSES].astype(jnp.float32)


def mlp_forward_ref(x_nchw, params):
    """Pure-JAX reference mirroring the kernel's bf16/f32 dtype path."""
    w1, b1, w2, b2, w3, b3, w4, b4 = params
    B = x_nchw.shape[0]
    x = x_nchw.reshape(B, K_IN).astype(jnp.bfloat16)
    h = jnp.maximum(jnp.dot(x, w1, preferred_element_type=jnp.float32) + b1, 0.0)
    h = jnp.maximum(jnp.dot(h.astype(jnp.bfloat16), w2,
                            preferred_element_type=jnp.float32) + b2, 0.0)
    h = jnp.maximum(jnp.dot(h.astype(jnp.bfloat16), w3,
                            preferred_element_type=jnp.float32) + b3, 0.0)
    logits = (jnp.dot(h.astype(jnp.bfloat16), w4,
                      preferred_element_type=jnp.float32) + b4)[:, :N_CLASSES]
    return jax.nn.log_softmax(logits, axis=1)


if __name__ == "__main__":
    key = jax.random.PRNGKey(0)
    k_params, k_x = jax.random.split(key)

    params = init_mlp_params(k_params)

    # Small MNIST-like batch: NCHW [2, 1, 28, 28]
    x = jax.random.normal(k_x, (2, 1, 28, 28), dtype=jnp.float32)

    out = mlp_forward(x, params)
    out = jax.block_until_ready(out)

    ref = mlp_forward_ref(x, params)
    assert out.shape == (2, 10), out.shape
    assert bool(jnp.all(jnp.isfinite(out))), "non-finite output"
    # bf16 MXU inputs + bf16 output slab -> loosened tolerance vs reference.
    assert jnp.allclose(out, ref, atol=2e-2, rtol=2e-2), \
        "Pallas output mismatch vs reference"

    print("KERNEL_OK")
</pallas_src>

<mosaic_0001>
module attributes {stable_mosaic.version = 11 : i64} {
  func.func @mlp_kernel(%arg0: i32, %arg1: memref<16x784xf32, #tpu.memory_space<vmem>>, %arg2: memref<784x256xbf16, #tpu.memory_space<vmem>>, %arg3: memref<1x256xf32, #tpu.memory_space<vmem>>, %arg4: memref<256x256xbf16, #tpu.memory_space<vmem>>, %arg5: memref<1x256xf32, #tpu.memory_space<vmem>>, %arg6: memref<256x64xbf16, #tpu.memory_space<vmem>>, %arg7: memref<1x64xf32, #tpu.memory_space<vmem>>, %arg8: memref<64x128xbf16, #tpu.memory_space<vmem>>, %arg9: memref<1x128xf32, #tpu.memory_space<vmem>>, %arg10: memref<16x128xbf16, #tpu.memory_space<vmem>>) attributes {dimension_semantics = [#tpu.dimension_semantics<parallel>], iteration_bounds = array<i64: 1>, scalar_prefetch = 0 : i64, scratch_operands = 0 : i64, tpu.core_type = #tpu.core_type<tc>, window_params = [{transform_indices = @transform_0, window_bounds = array<i64: 16, 784>}, {pipeline_mode = #tpu.pipeline_mode<synchronous>, transform_indices = @transform_1, window_bounds = array<i64: 784, 256>}, {pipeline_mode = #tpu.pipeline_mode<synchronous>, transform_indices = @transform_2, window_bounds = array<i64: 1, 256>}, {pipeline_mode = #tpu.pipeline_mode<synchronous>, transform_indices = @transform_3, window_bounds = array<i64: 256, 256>}, {pipeline_mode = #tpu.pipeline_mode<synchronous>, transform_indices = @transform_4, window_bounds = array<i64: 1, 256>}, {pipeline_mode = #tpu.pipeline_mode<synchronous>, transform_indices = @transform_5, window_bounds = array<i64: 256, 64>}, {pipeline_mode = #tpu.pipeline_mode<synchronous>, transform_indices = @transform_6, window_bounds = array<i64: 1, 64>}, {pipeline_mode = #tpu.pipeline_mode<synchronous>, transform_indices = @transform_7, window_bounds = array<i64: 64, 128>}, {pipeline_mode = #tpu.pipeline_mode<synchronous>, transform_indices = @transform_8, window_bounds = array<i64: 1, 128>}, {transform_indices = @transform_9, window_bounds = array<i64: 16, 128>}]} {
    %c0 = arith.constant 0 : index
    %c0_0 = arith.constant 0 : index
    %0 = vector.load %arg1[%c0, %c0_0] : memref<16x784xf32, #tpu.memory_space<vmem>>, vector<16x784xf32>
    %1 = arith.truncf %0 : vector<16x784xf32> to vector<16x784xbf16>
    %c0_1 = arith.constant 0 : index
    %c0_2 = arith.constant 0 : index
    %2 = vector.load %arg2[%c0_1, %c0_2] : memref<784x256xbf16, #tpu.memory_space<vmem>>, vector<784x256xbf16>
    %cst = arith.constant dense<0.000000e+00> : vector<16x256xf32>
    %3 = tpu.matmul %1, %2, %cst {dimension_numbers = #tpu.dot_dimension_numbers<[1], [0], [0], [1], [0, 0, 1, 1], [], []>} : vector<16x784xbf16>, vector<784x256xbf16>, vector<16x256xf32> -> vector<16x256xf32>
    %c0_3 = arith.constant 0 : index
    %c0_4 = arith.constant 0 : index
    %4 = vector.load %arg3[%c0_3, %c0_4] : memref<1x256xf32, #tpu.memory_space<vmem>>, vector<1x256xf32>
    %5 = vector.broadcast %4 : vector<1x256xf32> to vector<16x256xf32>
    %6 = arith.addf %3, %5 : vector<16x256xf32>
    %cst_5 = arith.constant 0.000000e+00 : f32
    %7 = vector.broadcast %cst_5 : f32 to vector<16x256xf32>
    %8 = arith.maximumf %6, %7 : vector<16x256xf32>
    %9 = arith.truncf %8 : vector<16x256xf32> to vector<16x256xbf16>
    %c0_6 = arith.constant 0 : index
    %c0_7 = arith.constant 0 : index
    %10 = vector.load %arg4[%c0_6, %c0_7] : memref<256x256xbf16, #tpu.memory_space<vmem>>, vector<256x256xbf16>
    %cst_8 = arith.constant dense<0.000000e+00> : vector<16x256xf32>
    %11 = tpu.matmul %9, %10, %cst_8 {dimension_numbers = #tpu.dot_dimension_numbers<[1], [0], [0], [1], [0, 0, 1, 1], [], []>} : vector<16x256xbf16>, vector<256x256xbf16>, vector<16x256xf32> -> vector<16x256xf32>
    %c0_9 = arith.constant 0 : index
    %c0_10 = arith.constant 0 : index
    %12 = vector.load %arg5[%c0_9, %c0_10] : memref<1x256xf32, #tpu.memory_space<vmem>>, vector<1x256xf32>
    %13 = vector.broadcast %12 : vector<1x256xf32> to vector<16x256xf32>
    %14 = arith.addf %11, %13 : vector<16x256xf32>
    %cst_11 = arith.constant 0.000000e+00 : f32
    %15 = vector.broadcast %cst_11 : f32 to vector<16x256xf32>
    %16 = arith.maximumf %14, %15 : vector<16x256xf32>
    %17 = arith.truncf %16 : vector<16x256xf32> to vector<16x256xbf16>
    %c0_12 = arith.constant 0 : index
    %c0_13 = arith.constant 0 : index
    %18 = vector.load %arg6[%c0_12, %c0_13] : memref<256x64xbf16, #tpu.memory_space<vmem>>, vector<256x64xbf16>
    %cst_14 = arith.constant dense<0.000000e+00> : vector<16x64xf32>
    %19 = tpu.matmul %17, %18, %cst_14 {dimension_numbers = #tpu.dot_dimension_numbers<[1], [0], [0], [1], [0, 0, 1, 1], [], []>} : vector<16x256xbf16>, vector<256x64xbf16>, vector<16x64xf32> -> vector<16x64xf32>
    %c0_15 = arith.constant 0 : index
    %c0_16 = arith.constant 0 : index
    %20 = vector.load %arg7[%c0_15, %c0_16] : memref<1x64xf32, #tpu.memory_space<vmem>>, vector<1x64xf32>
    %21 = vector.broadcast %20 : vector<1x64xf32> to vector<16x64xf32>
    %22 = arith.addf %19, %21 : vector<16x64xf32>
    %cst_17 = arith.constant 0.000000e+00 : f32
    %23 = vector.broadcast %cst_17 : f32 to vector<16x64xf32>
    %24 = arith.maximumf %22, %23 : vector<16x64xf32>
    %25 = arith.truncf %24 : vector<16x64xf32> to vector<16x64xbf16>
    %c0_18 = arith.constant 0 : index
    %c0_19 = arith.constant 0 : index
    %26 = vector.load %arg8[%c0_18, %c0_19] : memref<64x128xbf16, #tpu.memory_space<vmem>>, vector<64x128xbf16>
    %cst_20 = arith.constant dense<0.000000e+00> : vector<16x128xf32>
    %27 = tpu.matmul %25, %26, %cst_20 {dimension_numbers = #tpu.dot_dimension_numbers<[1], [0], [0], [1], [0, 0, 1, 1], [], []>} : vector<16x64xbf16>, vector<64x128xbf16>, vector<16x128xf32> -> vector<16x128xf32>
    %c0_21 = arith.constant 0 : index
    %c0_22 = arith.constant 0 : index
    %28 = vector.load %arg9[%c0_21, %c0_22] : memref<1x128xf32, #tpu.memory_space<vmem>>, vector<1x128xf32>
    %29 = vector.broadcast %28 : vector<1x128xf32> to vector<16x128xf32>
    %30 = arith.addf %27, %29 : vector<16x128xf32>
    %31 = tpu.iota {dimensions = array<i32: 1>} : vector<16x128xi32>
    %c10_i32 = arith.constant 10 : i32
    %32 = vector.broadcast %c10_i32 : i32 to vector<16x128xi32>
    %33 = arith.cmpi slt, %31, %32 : vector<16x128xi32>
    %cst_23 = arith.constant -1.000000e+30 : f32
    %34 = vector.broadcast %cst_23 : f32 to vector<16x128xf32>
    %35 = arith.select %33, %30, %34 : vector<16x128xi1>, vector<16x128xf32>
    %cst_24 = arith.constant dense<0xFF800000> : vector<16xf32>
    %36 = vector.multi_reduction <maximumf>, %35, %cst_24 [1] : vector<16x128xf32> to vector<16xf32>
    %37 = vector.shape_cast %36 : vector<16xf32> to vector<16x1xf32>
    %38 = vector.broadcast %37 : vector<16x1xf32> to vector<16x128xf32>
    %39 = arith.subf %35, %38 : vector<16x128xf32>
    %40 = math.exp %39 : vector<16x128xf32>
    %cst_25 = arith.constant dense<0.000000e+00> : vector<16xf32>
    %41 = vector.multi_reduction <add>, %40, %cst_25 [1] : vector<16x128xf32> to vector<16xf32>
    %42 = vector.shape_cast %41 : vector<16xf32> to vector<16x1xf32>
    %43 = math.log %42 : vector<16x1xf32>
    %44 = vector.broadcast %43 : vector<16x1xf32> to vector<16x128xf32>
    %45 = arith.subf %39, %44 : vector<16x128xf32>
    %46 = arith.truncf %45 : vector<16x128xf32> to vector<16x128xbf16>
    %c0_26 = arith.constant 0 : index
    %c0_27 = arith.constant 0 : index
    %47 = vector.load %arg10[%c0_26, %c0_27] : memref<16x128xbf16, #tpu.memory_space<vmem>>, vector<16x128xbf16>
    tpu.vector_store %arg10[%c0_26, %c0_27], %46 {strides = array<i32>} : memref<16x128xbf16, #tpu.memory_space<vmem>>, vector<16x128xbf16>,
    return
  }
  func.func @transform_0(%arg0: i32) -> (i32, i32) {
    %c0_i32 = arith.constant 0 : i32
    %c0_i32_0 = arith.constant 0 : i32
    return %arg0, %c0_i32 : i32, i32
  }
  func.func @transform_1(%arg0: i32) -> (i32, i32) {
    %c0_i32 = arith.constant 0 : i32
    %c0_i32_0 = arith.constant 0 : i32
    %c0_i32_1 = arith.constant 0 : i32
    return %c0_i32, %c0_i32_0 : i32, i32
  }
  func.func @transform_2(%arg0: i32) -> (i32, i32) {
    %c0_i32 = arith.constant 0 : i32
    %c0_i32_0 = arith.constant 0 : i32
    %c0_i32_1 = arith.constant 0 : i32
    return %c0_i32, %c0_i32_0 : i32, i32
  }
  func.func @transform_3(%arg0: i32) -> (i32, i32) {
    %c0_i32 = arith.constant 0 : i32
    %c0_i32_0 = arith.constant 0 : i32
    %c0_i32_1 = arith.constant 0 : i32
    return %c0_i32, %c0_i32_0 : i32, i32
  }
  func.func @transform_4(%arg0: i32) -> (i32, i32) {
    %c0_i32 = arith.constant 0 : i32
    %c0_i32_0 = arith.constant 0 : i32
    %c0_i32_1 = arith.constant 0 : i32
    return %c0_i32, %c0_i32_0 : i32, i32
  }
  func.func @transform_5(%arg0: i32) -> (i32, i32) {
    %c0_i32 = arith.constant 0 : i32
    %c0_i32_0 = arith.constant 0 : i32
    %c0_i32_1 = arith.constant 0 : i32
    return %c0_i32, %c0_i32_0 : i32, i32
  }
  func.func @transform_6(%arg0: i32) -> (i32, i32) {
    %c0_i32 = arith.constant 0 : i32
    %c0_i32_0 = arith.constant 0 : i32
    %c0_i32_1 = arith.constant 0 : i32
    return %c0_i32, %c0_i32_0 : i32, i32
  }
  func.func @transform_7(%arg0: i32) -> (i32, i32) {
    %c0_i32 = arith.constant 0 : i32
    %c0_i32_0 = arith.constant 0 : i32
    %c0_i32_1 = arith.constant 0 : i32
    return %c0_i32, %c0_i32_0 : i32, i32
  }
  func.func @transform_8(%arg0: i32) -> (i32, i32) {
    %c0_i32 = arith.constant 0 : i32
    %c0_i32_0 = arith.constant 0 : i32
    %c0_i32_1 = arith.constant 0 : i32
    return %c0_i32, %c0_i32_0 : i32, i32
  }
  func.func @transform_9(%arg0: i32) -> (i32, i32) {
    %c0_i32 = arith.constant 0 : i32
    %c0_i32_0 = arith.constant 0 : i32
    return %arg0, %c0_i32 : i32, i32
  }
}

</mosaic_0001>

<llo_original>
// kernel: mlp_forward.1
$region0: #{mlp_forward.1}
  #allocation0 [shape = 'u32[]', space=smem, size = 0x4, offset = 0x4, fixed_abs, tag = 'smem constant byte address 0x4 - core index']
  #allocation1 [shape = 'u32[144,128]{1,0:T(1,128)}', space=vmem, size = 0x12000, scoped, tag = 'internal scratch']
  %s0 = inlined_call_operand.vmem [shape: f32[16,784], index: 0, kind: input, shape index: {}]
  %s1 = inlined_call_operand.hbm [shape: bf16[784,256], index: 1, kind: input, shape index: {}]
  %s2 = inlined_call_operand.vmem [shape: f32[1,256], index: 2, kind: input, shape index: {}]
  %s3 = inlined_call_operand.vmem [shape: bf16[256,256], index: 3, kind: input, shape index: {}]
  %s4 = inlined_call_operand.vmem [shape: f32[1,256], index: 4, kind: input, shape index: {}]
  %s5 = inlined_call_operand.vmem [shape: bf16[256,64], index: 5, kind: input, shape index: {}]
  %s6 = inlined_call_operand.vmem [shape: f32[1,64], index: 6, kind: input, shape index: {}]
  %s7 = inlined_call_operand.vmem [shape: bf16[64,128], index: 7, kind: input, shape index: {}]
  %s8 = inlined_call_operand.vmem [shape: f32[1,128], index: 8, kind: input, shape index: {}]
  %s9 = inlined_call_operand.vmem [shape: bf16[16,128], index: 9, kind: output, shape index: {}]
  %s10 = sld [smem:[#allocation0]]
  $region50: #{mlp_forward.1} parent=0
    _
  %s12 = ssub.s32 1, %s10
  %s13 = scalar_select 0, %s12, %s10
  $region1: #{mlp_forward.1} parent=0
    #allocation2 [shape = 'u8[401408]{0}', space=vmem, size = 0x62000, scoped, tag = 'input window, operand 1, single buffered']
    #allocation3 [shape = 's32[1]{0}', space=sflag, size = 0x4, scoped, tag = 'scoped memory for mlp_forward.1']
    %14 = vsyncpa [#allocation3], 0
    // Predicated region
    $region2: #{mlp_forward.1} parent=1 // pred_check
      _
    $region3: #{mlp_forward.1} parent=1 // pred_check_branch
      %16 = sbr.rel (0) target = $region5
    $region4: #{mlp_forward.1} parent=1 // pred_region
      _
    $region5: #{mlp_forward.1} parent=1 // pred_fallthru
      _
    // Predicated region
    $region6: #{mlp_forward.1} parent=1 // pred_check
      _
    $region7: #{mlp_forward.1} parent=1 // pred_check_branch
      %18 = sbr.rel (0) target = $region9
    $region8: #{mlp_forward.1} parent=1 // pred_region
      %s20 = ssub.s32 12544, 12544
      %21 = vsyncadd [#allocation3], %s20
      %s22 = sshll.u32 [#allocation2], 4
      %s23 = int_to_ptr.vmem [resolvable:$true] %s22
      %28 = dma.hbm_to_vmem [thread:$0]  %s1, 12544, %s23, [#allocation3], 128, 128, 8
    $region9: #{mlp_forward.1} parent=1 // pred_fallthru
      _
    // Predicated region
    $region10: #{mlp_forward.1} parent=1 // pred_check
      _
    $region11: #{mlp_forward.1} parent=1 // pred_check_branch
      %30 = sbr.rel (0) target = $region13
    $region12: #{mlp_forward.1} parent=1 // pred_region
      _
    $region13: #{mlp_forward.1} parent=1 // pred_fallthru
      _
    // Predicated region
    $region14: #{mlp_forward.1} parent=1 // pred_check
      _
    $region15: #{mlp_forward.1} parent=1 // pred_check_branch
      %32 = sbr.rel (0) target = $region17
    $region16: #{mlp_forward.1} parent=1 // pred_region
      _
    $region17: #{mlp_forward.1} parent=1 // pred_fallthru
      _
    // Predicated region
    $region18: #{mlp_forward.1} parent=1 // pred_check
      _
    $region19: #{mlp_forward.1} parent=1 // pred_check_branch
      %34 = sbr.rel (0) target = $region21
    $region20: #{mlp_forward.1} parent=1 // pred_region
      _
    $region21: #{mlp_forward.1} parent=1 // pred_fallthru
      _
    // Predicated region
    $region22: #{mlp_forward.1} parent=1 // pred_check
      _
    $region23: #{mlp_forward.1} parent=1 // pred_check_branch
      %36 = sbr.rel (0) target = $region25
    $region24: #{mlp_forward.1} parent=1 // pred_region
      _
    $region25: #{mlp_forward.1} parent=1 // pred_fallthru
      _
    // Predicated region
    $region26: #{mlp_forward.1} parent=1 // pred_check
      _
    $region27: #{mlp_forward.1} parent=1 // pred_check_branch
      %38 = sbr.rel (0) target = $region29
    $region28: #{mlp_forward.1} parent=1 // pred_region
      _
    $region29: #{mlp_forward.1} parent=1 // pred_fallthru
      _
    // Predicated region
    $region30: #{mlp_forward.1} parent=1 // pred_check
      _
    $region31: #{mlp_forward.1} parent=1 // pred_check_branch
      %40 = sbr.rel (0) target = $region33
    $region32: #{mlp_forward.1} parent=1 // pred_region
      _
    $region33: #{mlp_forward.1} parent=1 // pred_fallthru
      _
    // Predicated region
    $region34: #{mlp_forward.1} parent=1 // pred_check
      _
    $region35: #{mlp_forward.1} parent=1 // pred_check_branch
      %42 = sbr.rel (0) target = $region37
    $region36: #{mlp_forward.1} parent=1 // pred_region
      _
    $region37: #{mlp_forward.1} parent=1 // pred_fallthru
      _
    // Predicated region
    $region38: #{mlp_forward.1} parent=1 // pred_check
      _
    $region39: #{mlp_forward.1} parent=1 // pred_check_branch
      %44 = sbr.rel (0) target = $region41
    $region40: #{mlp_forward.1} parent=1 // pred_region
      %45 = dma.done [#allocation3], 12544
    $region41: #{mlp_forward.1} parent=1 // pred_fallthru
      _
    %v47 = vld [vmem:[%s0] sm:$0xff]
    %v48 = vld [vmem:[%s0 + $0x8] sm:$0xff]
    %v49 = vld [vmem:[%s0 + $0x10] sm:$0xff]
    %v50 = vld [vmem:[%s0 + $0x18] sm:$0xff]
    %v51 = vld [vmem:[%s0 + $0x20] sm:$0xff]
    %v52 = vld [vmem:[%s0 + $0x28] sm:$0xff]
    %v53 = vld [vmem:[%s0 + $0x30] sm:$0xff]
    %v54 = vld [vmem:[%s0 + $0x38] sm:$0xff]
    %v55 = vld [vmem:[%s0 + $0x40] sm:$0xff]
    %v56 = vld [vmem:[%s0 + $0x48] sm:$0xff]
    %v57 = vld [vmem:[%s0 + $0x50] sm:$0xff]
    %v58 = vld [vmem:[%s0 + $0x58] sm:$0xff]
    %v59 = vld [vmem:[%s0 + $0x60] sm:$0xff]
    %v60 = vld [vmem:[%s0 + $0x68] sm:$0xff]
    %v61 = vpack.c.bf16 %v54, %v47
    %v62 = vpack.c.bf16 %v55, %v48
    %v63 = vpack.c.bf16 %v56, %v49
    %v64 = vpack.c.bf16 %v57, %v50
    %v65 = vpack.c.bf16 %v58, %v51
    %v66 = vpack.c.bf16 %v59, %v52
    %v67 = vpack.c.bf16 %v60, %v53
    %v68 = vld [vmem:[#allocation2] sm:$0xff]
    %v69 = vld [vmem:[#allocation2 + $0x8] sm:$0xff]
    %v70 = vld [vmem:[#allocation2 + $0x10] sm:$0xff]
    %v71 = vld [vmem:[#allocation2 + $0x18] sm:$0xff]
    %v72 = vld [vmem:[#allocation2 + $0x20] sm:$0xff]
    %v73 = vld [vmem:[#allocation2 + $0x28] sm:$0xff]
    %v74 = vld [vmem:[#allocation2 + $0x30] sm:$0xff]
    %v75 = vld [vmem:[#allocation2 + $0x38] sm:$0xff]
    %v76 = vld [vmem:[#allocation2 + $0x40] sm:$0xff]
    %v77 = vld [vmem:[#allocation2 + $0x48] sm:$0xff]
    %v78 = vld [vmem:[#allocation2 + $0x50] sm:$0xff]
    %v79 = vld [vmem:[#allocation2 + $0x58] sm:$0xff]
    %v80 = vld [vmem:[#allocation2 + $0x60] sm:$0xff]
    %v81 = vld [vmem:[#allocation2 + $0x68] sm:$0xff]
    %v82 = vld [vmem:[#allocation2 + $0x70] sm:$0xff]
    %v83 = vld [vmem:[#allocation2 + $0x78] sm:$0xff]
    %v84 = vld [vmem:[#allocation2 + $0x80] sm:$0xff]
    %v85 = vld [vmem:[#allocation2 + $0x88] sm:$0xff]
    %v86 = vld [vmem:[#allocation2 + $0x90] sm:$0xff]
    %v87 = vld [vmem:[#allocation2 + $0x98] sm:$0xff]
    %v88 = vld [vmem:[#allocation2 + $0xa0] sm:$0xff]
    %v89 = vld [vmem:[#allocation2 + $0xa8] sm:$0xff]
    %v90 = vld [vmem:[#allocation2 + $0xb0] sm:$0xff]
    %v91 = vld [vmem:[#allocation2 + $0xb8] sm:$0xff]
    %v92 = vld [vmem:[#allocation2 + $0xc0] sm:$0xff]
    %v93 = vld [vmem:[#allocation2 + $0xc8] sm:$0xff]
    %v94 = vld [vmem:[#allocation2 + $0xd0] sm:$0xff]
    %v95 = vld [vmem:[#allocation2 + $0xd8] sm:$0xff]
    %v96 = vld [vmem:[#allocation2 + $0xe0] sm:$0xff]
    %v97 = vld [vmem:[#allocation2 + $0xe8] sm:$0xff]
    %v98 = vld [vmem:[#allocation2 + $0xf0] sm:$0xff]
    %v99 = vld [vmem:[#allocation2 + $0xf8] sm:$0xff]
    %v100 = vld [vmem:[#allocation2 + $0x100] sm:$0xff]
    %v101 = vld [vmem:[#allocation2 + $0x108] sm:$0xff]
    %v102 = vld [vmem:[#allocation2 + $0x110] sm:$0xff]
    %v103 = vld [vmem:[#allocation2 + $0x118] sm:$0xff]
    %v104 = vld [vmem:[#allocation2 + $0x120] sm:$0xff]
    %v105 = vld [vmem:[#allocation2 + $0x128] sm:$0xff]
    %v106 = vld [vmem:[#allocation2 + $0x130] sm:$0xff]
    %v107 = vld [vmem:[#allocation2 + $0x138] sm:$0xff]
    %v108 = vld [vmem:[#allocation2 + $0x140] sm:$0xff]
    %v109 = vld [vmem:[#allocation2 + $0x148] sm:$0xff]
    %v110 = vld [vmem:[#allocation2 + $0x150] sm:$0xff]
    %v111 = vld [vmem:[#allocation2 + $0x158] sm:$0xff]
    %v112 = vld [vmem:[#allocation2 + $0x160] sm:$0xff]
    %v113 = vld [vmem:[#allocation2 + $0x168] sm:$0xff]
    %v114 = vld [vmem:[#allocation2 + $0x170] sm:$0xff]
    %v115 = vld [vmem:[#allocation2 + $0x178] sm:$0xff]
    %v116 = vld [vmem:[#allocation2 + $0x180] sm:$0xff]
    %v117 = vld [vmem:[#allocation2 + $0x188] sm:$0xff]
    %v118 = vld [vmem:[#allocation2 + $0x190] sm:$0xff]
    %v119 = vld [vmem:[#allocation2 + $0x198] sm:$0xff]
    %v120 = vld [vmem:[#allocation2 + $0x1a0] sm:$0xff]
    %v121 = vld [vmem:[#allocation2 + $0x1a8] sm:$0xff]
    %v122 = vld [vmem:[#allocation2 + $0x1b0] sm:$0xff]
    %v123 = vld [vmem:[#allocation2 + $0x1b8] sm:$0xff]
    %v124 = vld [vmem:[#allocation2 + $0x1c0] sm:$0xff]
    %v125 = vld [vmem:[#allocation2 + $0x1c8] sm:$0xff]
    %v126 = vld [vmem:[#allocation2 + $0x1d0] sm:$0xff]
    %v127 = vld [vmem:[#allocation2 + $0x1d8] sm:$0xff]
    %v128 = vld [vmem:[#allocation2 + $0x1e0] sm:$0xff]
    %v129 = vld [vmem:[#allocation2 + $0x1e8] sm:$0xff]
    %v130 = vld [vmem:[#allocation2 + $0x1f0] sm:$0xff]
    %v131 = vld [vmem:[#allocation2 + $0x1f8] sm:$0xff]
    %v132 = vld [vmem:[#allocation2 + $0x200] sm:$0xff]
    %v133 = vld [vmem:[#allocation2 + $0x208] sm:$0xff]
    %v134 = vld [vmem:[#allocation2 + $0x210] sm:$0xff]
    %v135 = vld [vmem:[#allocation2 + $0x218] sm:$0xff]
    %v136 = vld [vmem:[#allocation2 + $0x220] sm:$0xff]
    %v137 = vld [vmem:[#allocation2 + $0x228] sm:$0xff]
    %v138 = vld [vmem:[#allocation2 + $0x230] sm:$0xff]
    %v139 = vld [vmem:[#allocation2 + $0x238] sm:$0xff]
    %v140 = vld [vmem:[#allocation2 + $0x240] sm:$0xff]
    %v141 = vld [vmem:[#allocation2 + $0x248] sm:$0xff]
    %v142 = vld [vmem:[#allocation2 + $0x250] sm:$0xff]
    %v143 = vld [vmem:[#allocation2 + $0x258] sm:$0xff]
    %v144 = vld [vmem:[#allocation2 + $0x260] sm:$0xff]
    %v145 = vld [vmem:[#allocation2 + $0x268] sm:$0xff]
    %v146 = vld [vmem:[#allocation2 + $0x270] sm:$0xff]
    %v147 = vld [vmem:[#allocation2 + $0x278] sm:$0xff]
    %v148 = vld [vmem:[#allocation2 + $0x280] sm:$0xff]
    %v149 = vld [vmem:[#allocation2 + $0x288] sm:$0xff]
    %v150 = vld [vmem:[#allocation2 + $0x290] sm:$0xff]
    %v151 = vld [vmem:[#allocation2 + $0x298] sm:$0xff]
    %v152 = vld [vmem:[#allocation2 + $0x2a0] sm:$0xff]
    %v153 = vld [vmem:[#allocation2 + $0x2a8] sm:$0xff]
    %v154 = vld [vmem:[#allocation2 + $0x2b0] sm:$0xff]
    %v155 = vld [vmem:[#allocation2 + $0x2b8] sm:$0xff]
    %v156 = vld [vmem:[#allocation2 + $0x2c0] sm:$0xff]
    %v157 = vld [vmem:[#allocation2 + $0x2c8] sm:$0xff]
    %v158 = vld [vmem:[#allocation2 + $0x2d0] sm:$0xff]
    %v159 = vld [vmem:[#allocation2 + $0x2d8] sm:$0xff]
    %v160 = vld [vmem:[#allocation2 + $0x2e0] sm:$0xff]
    %v161 = vld [vmem:[#allocation2 + $0x2e8] sm:$0xff]
    %v162 = vld [vmem:[#allocation2 + $0x2f0] sm:$0xff]
    %v163 = vld [vmem:[#allocation2 + $0x2f8] sm:$0xff]
    %v164 = vld [vmem:[#allocation2 + $0x300] sm:$0xff]
    %v165 = vld [vmem:[#allocation2 + $0x308] sm:$0xff]
    %v166 = vld [vmem:[%s2] sm:$0x3]
    %v168 = vlaneseq
    %v169 = vshrl.u32 %v168, 7
    %v170 = vsub.s32 0, %v169
    %v171 = vrot.slane %v166, %v170
    %v172 = vlaneseq
    %v173 = vshrl.u32 %v172, 7
    %v174 = vsub.s32 1, %v173
    %v175 = vrot.slane %v166, %v174
    %v276 = vunpack.c.l.b16 %v68
    %v277 = vunpack.c.h.b16 %v68
    %v278 = vunpack.c.l.b16 %v69
    %v279 = vunpack.c.h.b16 %v69
    %v280 = vunpack.c.l.b16 %v70
    %v281 = vunpack.c.h.b16 %v70
    %v282 = vunpack.c.l.b16 %v71
    %v283 = vunpack.c.h.b16 %v71
    %v284 = vunpack.c.l.b16 %v72
    %v285 = vunpack.c.h.b16 %v72
    %v286 = vunpack.c.l.b16 %v73
    %v287 = vunpack.c.h.b16 %v73
    %v288 = vunpack.c.l.b16 %v74
    %v289 = vunpack.c.h.b16 %v74
    %v290 = vunpack.c.l.b16 %v75
    %v291 = vunpack.c.h.b16 %v75
    %v292 = vunpack.c.l.b16 %v76
    %v293 = vunpack.c.h.b16 %v76
    %v294 = vunpack.c.l.b16 %v77
    %v295 = vunpack.c.h.b16 %v77
    %v296 = vunpack.c.l.b16 %v78
    %v297 = vunpack.c.h.b16 %v78
    %v298 = vunpack.c.l.b16 %v79
    %v299 = vunpack.c.h.b16 %v79
    %v300 = vunpack.c.l.b16 %v80
    %v301 = vunpack.c.h.b16 %v80
    %v302 = vunpack.c.l.b16 %v81
    %v303 = vunpack.c.h.b16 %v81
    %v304 = vunpack.c.l.b16 %v82
    %v305 = vunpack.c.h.b16 %v82
    %v306 = vunpack.c.l.b16 %v83
    %v307 = vunpack.c.h.b16 %v83
    %v308 = vunpack.c.l.b16 %v84
    %v309 = vunpack.c.h.b16 %v84
    %v310 = vunpack.c.l.b16 %v85
    %v311 = vunpack.c.h.b16 %v85
    %v312 = vunpack.c.l.b16 %v86
    %v313 = vunpack.c.h.b16 %v86
    %v314 = vunpack.c.l.b16 %v87
    %v315 = vunpack.c.h.b16 %v87
    %v316 = vunpack.c.l.b16 %v88
    %v317 = vunpack.c.h.b16 %v88
    %v318 = vunpack.c.l.b16 %v89
    %v319 = vunpack.c.h.b16 %v89
    %v320 = vunpack.c.l.b16 %v90
    %v321 = vunpack.c.h.b16 %v90
    %v322 = vunpack.c.l.b16 %v91
    %v323 = vunpack.c.h.b16 %v91
    %v324 = vunpack.c.l.b16 %v92
    %v325 = vunpack.c.h.b16 %v92
    %v326 = vunpack.c.l.b16 %v93
    %v327 = vunpack.c.h.b16 %v93
    %v328 = vunpack.c.l.b16 %v94
    %v329 = vunpack.c.h.b16 %v94
    %v330 = vunpack.c.l.b16 %v95
    %v331 = vunpack.c.h.b16 %v95
    %v332 = vunpack.c.l.b16 %v96
    %v333 = vunpack.c.h.b16 %v96
    %v334 = vunpack.c.l.b16 %v97
    %v335 = vunpack.c.h.b16 %v97
    %v336 = vunpack.c.l.b16 %v98
    %v337 = vunpack.c.h.b16 %v98
    %v338 = vunpack.c.l.b16 %v99
    %v339 = vunpack.c.h.b16 %v99
    %v340 = vunpack.c.l.b16 %v100
    %v341 = vunpack.c.h.b16 %v100
    %v342 = vunpack.c.l.b16 %v101
    %v343 = vunpack.c.h.b16 %v101
    %v344 = vunpack.c.l.b16 %v102
    %v345 = vunpack.c.h.b16 %v102
    %v346 = vunpack.c.l.b16 %v103
    %v347 = vunpack.c.h.b16 %v103
    %v348 = vunpack.c.l.b16 %v104
    %v349 = vunpack.c.h.b16 %v104
    %v350 = vunpack.c.l.b16 %v105
    %v351 = vunpack.c.h.b16 %v105
    %v352 = vunpack.c.l.b16 %v106
    %v353 = vunpack.c.h.b16 %v106
    %v354 = vunpack.c.l.b16 %v107
    %v355 = vunpack.c.h.b16 %v107
    %v356 = vunpack.c.l.b16 %v108
    %v357 = vunpack.c.h.b16 %v108
    %v358 = vunpack.c.l.b16 %v109
    %v359 = vunpack.c.h.b16 %v109
    %v360 = vunpack.c.l.b16 %v110
    %v361 = vunpack.c.h.b16 %v110
    %v362 = vunpack.c.l.b16 %v111
    %v363 = vunpack.c.h.b16 %v111
    %v364 = vunpack.c.l.b16 %v112
    %v365 = vunpack.c.h.b16 %v112
    %v366 = vunpack.c.l.b16 %v113
    %v367 = vunpack.c.h.b16 %v113
    %v368 = vunpack.c.l.b16 %v114
    %v369 = vunpack.c.h.b16 %v114
    %v370 = vunpack.c.l.b16 %v115
    %v371 = vunpack.c.h.b16 %v115
    %v372 = vunpack.c.l.b16 %v116
    %v373 = vunpack.c.h.b16 %v116
    %v374 = vunpack.c.l.b16 %v117
    %v375 = vunpack.c.h.b16 %v117
    %v376 = vunpack.c.l.b16 %v118
    %v377 = vunpack.c.h.b16 %v118
    %v378 = vunpack.c.l.b16 %v119
    %v379 = vunpack.c.h.b16 %v119
    %v380 = vunpack.c.l.b16 %v120
    %v381 = vunpack.c.h.b16 %v120
    %v382 = vunpack.c.l.b16 %v121
    %v383 = vunpack.c.h.b16 %v121
    %v384 = vunpack.c.l.b16 %v122
    %v385 = vunpack.c.h.b16 %v122
    %v386 = vunpack.c.l.b16 %v123
    %v387 = vunpack.c.h.b16 %v123
    %v388 = vunpack.c.l.b16 %v124
    %v389 = vunpack.c.h.b16 %v124
    %v390 = vunpack.c.l.b16 %v125
    %v391 = vunpack.c.h.b16 %v125
    %v392 = vunpack.c.l.b16 %v126
    %v393 = vunpack.c.h.b16 %v126
    %v394 = vunpack.c.l.b16 %v127
    %v395 = vunpack.c.h.b16 %v127
    %v396 = vunpack.c.l.b16 %v128
    %v397 = vunpack.c.h.b16 %v128
    %v398 = vunpack.c.l.b16 %v129
    %v399 = vunpack.c.h.b16 %v129
    %v400 = vunpack.c.l.b16 %v130
    %v401 = vunpack.c.h.b16 %v130
    %v402 = vunpack.c.l.b16 %v131
    %v403 = vunpack.c.h.b16 %v131
    %v404 = vunpack.c.l.b16 %v132
    %v405 = vunpack.c.h.b16 %v132
    %v406 = vunpack.c.l.b16 %v133
    %v407 = vunpack.c.h.b16 %v133
    %v408 = vunpack.c.l.b16 %v134
    %v409 = vunpack.c.h.b16 %v134
    %v410 = vunpack.c.l.b16 %v135
    %v411 = vunpack.c.h.b16 %v135
    %v412 = vunpack.c.l.b16 %v136
    %v413 = vunpack.c.h.b16 %v136
    %v414 = vunpack.c.l.b16 %v137
    %v415 = vunpack.c.h.b16 %v137
    %v416 = vunpack.c.l.b16 %v138
    %v417 = vunpack.c.h.b16 %v138
    %v418 = vunpack.c.l.b16 %v139
    %v419 = vunpack.c.h.b16 %v139
    %v420 = vunpack.c.l.b16 %v140
    %v421 = vunpack.c.h.b16 %v140
    %v422 = vunpack.c.l.b16 %v141
    %v423 = vunpack.c.h.b16 %v141
    %v424 = vunpack.c.l.b16 %v142
    %v425 = vunpack.c.h.b16 %v142
    %v426 = vunpack.c.l.b16 %v143
    %v427 = vunpack.c.h.b16 %v143
    %v428 = vunpack.c.l.b16 %v144
    %v429 = vunpack.c.h.b16 %v144
    %v430 = vunpack.c.l.b16 %v145
    %v431 = vunpack.c.h.b16 %v145
    %v432 = vunpack.c.l.b16 %v146
    %v433 = vunpack.c.h.b16 %v146
    %v434 = vunpack.c.l.b16 %v147
    %v435 = vunpack.c.h.b16 %v147
    %v436 = vunpack.c.l.b16 %v148
    %v437 = vunpack.c.h.b16 %v148
    %v438 = vunpack.c.l.b16 %v149
    %v439 = vunpack.c.h.b16 %v149
    %v440 = vunpack.c.l.b16 %v150
    %v441 = vunpack.c.h.b16 %v150
    %v442 = vunpack.c.l.b16 %v151
    %v443 = vunpack.c.h.b16 %v151
    %v444 = vunpack.c.l.b16 %v152
    %v445 = vunpack.c.h.b16 %v152
    %v446 = vunpack.c.l.b16 %v153
    %v447 = vunpack.c.h.b16 %v153
    %v448 = vunpack.c.l.b16 %v154
    %v449 = vunpack.c.h.b16 %v154
    %v450 = vunpack.c.l.b16 %v155
    %v451 = vunpack.c.h.b16 %v155
    %v452 = vunpack.c.l.b16 %v156
    %v453 = vunpack.c.h.b16 %v156
    %v454 = vunpack.c.l.b16 %v157
    %v455 = vunpack.c.h.b16 %v157
    %v456 = vunpack.c.l.b16 %v158
    %v457 = vunpack.c.h.b16 %v158
    %v458 = vunpack.c.l.b16 %v159
    %v459 = vunpack.c.h.b16 %v159
    %v460 = vunpack.c.l.b16 %v160
    %v461 = vunpack.c.h.b16 %v160
    %v462 = vunpack.c.l.b16 %v161
    %v463 = vunpack.c.h.b16 %v161
    %v464 = vunpack.c.l.b16 %v162
    %v465 = vunpack.c.h.b16 %v162
    %v466 = vunpack.c.l.b16 %v163
    %v467 = vunpack.c.h.b16 %v163
    %v468 = vunpack.c.l.b16 %v164
    %v469 = vunpack.c.h.b16 %v164
    %v470 = vunpack.c.l.b16 %v165
    %v471 = vunpack.c.h.b16 %v165
    %v472 = vpack.c.b16 %v278, %v276
    %v473 = vpack.c.b16 %v279, %v277
    %v474 = vpack.c.b16 %v282, %v280
    %v475 = vpack.c.b16 %v283, %v281
    %v476 = vpack.c.b16 %v286, %v284
    %v477 = vpack.c.b16 %v287, %v285
    %v478 = vpack.c.b16 %v290, %v288
    %v479 = vpack.c.b16 %v291, %v289
    %v480 = vpack.c.b16 %v294, %v292
    %v481 = vpack.c.b16 %v295, %v293
    %v482 = vpack.c.b16 %v298, %v296
    %v483 = vpack.c.b16 %v299, %v297
    %v484 = vpack.c.b16 %v302, %v300
    %v485 = vpack.c.b16 %v303, %v301
    %v486 = vpack.c.b16 %v306, %v304
    %v487 = vpack.c.b16 %v307, %v305
    %v488 = vpack.c.b16 %v310, %v308
    %v489 = vpack.c.b16 %v311, %v309
    %v490 = vpack.c.b16 %v314, %v312
    %v491 = vpack.c.b16 %v315, %v313
    %v492 = vpack.c.b16 %v318, %v316
    %v493 = vpack.c.b16 %v319, %v317
    %v494 = vpack.c.b16 %v322, %v320
    %v495 = vpack.c.b16 %v323, %v321
    %v496 = vpack.c.b16 %v326, %v324
    %v497 = vpack.c.b16 %v327, %v325
    %v498 = vpack.c.b16 %v330, %v328
    %v499 = vpack.c.b16 %v331, %v329
    %v500 = vpack.c.b16 %v334, %v332
    %v501 = vpack.c.b16 %v335, %v333
    %v502 = vpack.c.b16 %v338, %v336
    %v503 = vpack.c.b16 %v339, %v337
    %v504 = vpack.c.b16 %v342, %v340
    %v505 = vpack.c.b16 %v343, %v341
    %v506 = vpack.c.b16 %v346, %v344
    %v507 = vpack.c.b16 %v347, %v345
    %v508 = vpack.c.b16 %v350, %v348
    %v509 = vpack.c.b16 %v351, %v349
    %v510 = vpack.c.b16 %v354, %v352
    %v511 = vpack.c.b16 %v355, %v353
    %v512 = vpack.c.b16 %v358, %v356
    %v513 = vpack.c.b16 %v359, %v357
    %v514 = vpack.c.b16 %v362, %v360
    %v515 = vpack.c.b16 %v363, %v361
    %v516 = vpack.c.b16 %v366, %v364
    %v517 = vpack.c.b16 %v367, %v365
    %v518 = vpack.c.b16 %v370, %v368
    %v519 = vpack.c.b16 %v371, %v369
    %v520 = vpack.c.b16 %v374, %v372
    %v521 = vpack.c.b16 %v375, %v373
    %v522 = vpack.c.b16 %v378, %v376
    %v523 = vpack.c.b16 %v379, %v377
    %v524 = vpack.c.b16 %v382, %v380
    %v525 = vpack.c.b16 %v383, %v381
    %v526 = vpack.c.b16 %v386, %v384
    %v527 = vpack.c.b16 %v387, %v385
    %v528 = vpack.c.b16 %v390, %v388
    %v529 = vpack.c.b16 %v391, %v389
    %v530 = vpack.c.b16 %v394, %v392
    %v531 = vpack.c.b16 %v395, %v393
    %v532 = vpack.c.b16 %v398, %v396
    %v533 = vpack.c.b16 %v399, %v397
    %v534 = vpack.c.b16 %v402, %v400
    %v535 = vpack.c.b16 %v403, %v401
    %v536 = vpack.c.b16 %v406, %v404
    %v537 = vpack.c.b16 %v407, %v405
    %v538 = vpack.c.b16 %v410, %v408
    %v539 = vpack.c.b16 %v411, %v409
    %v540 = vpack.c.b16 %v414, %v412
    %v541 = vpack.c.b16 %v415, %v413
    %v542 = vpack.c.b16 %v418, %v416
    %v543 = vpack.c.b16 %v419, %v417
    %v544 = vpack.c.b16 %v422, %v420
    %v545 = vpack.c.b16 %v423, %v421
    %v546 = vpack.c.b16 %v426, %v424
    %v547 = vpack.c.b16 %v427, %v425
    %v548 = vpack.c.b16 %v430, %v428
    %v549 = vpack.c.b16 %v431, %v429
    %v550 = vpack.c.b16 %v434, %v432
    %v551 = vpack.c.b16 %v435, %v433
    %v552 = vpack.c.b16 %v438, %v436
    %v553 = vpack.c.b16 %v439, %v437
    %v554 = vpack.c.b16 %v442, %v440
    %v555 = vpack.c.b16 %v443, %v441
    %v556 = vpack.c.b16 %v446, %v444
    %v557 = vpack.c.b16 %v447, %v445
    %v558 = vpack.c.b16 %v450, %v448
    %v559 = vpack.c.b16 %v451, %v449
    %v560 = vpack.c.b16 %v454, %v452
    %v561 = vpack.c.b16 %v455, %v453
    %v562 = vpack.c.b16 %v458, %v456
    %v563 = vpack.c.b16 %v459, %v457
    %v564 = vpack.c.b16 %v462, %v460
    %v565 = vpack.c.b16 %v463, %v461
    %v566 = vpack.c.b16 %v466, %v464
    %v567 = vpack.c.b16 %v467, %v465
    %v568 = vpack.c.b16 %v470, %v468
    %v569 = vpack.c.b16 %v471, %v469
    %vm668 = vcmask 130048
    %v670 = vsel %vm668, %v67, 0
    %672 = vmatprep.subr.bf16.mxu0 %v487
    %673 = vmatpush1.bf16.msra.mxu0 %v486
    %674 = vmatprep.subr.bf16.mxu0 %v485
    %675 = vmatpush1.bf16.msra.mxu0 %v484
    %676 = vmatprep.subr.bf16.mxu0 %v483
    %677 = vmatpush1.bf16.msra.mxu0 %v482
    %678 = vmatprep.subr.bf16.mxu0 %v481
    %679 = vmatpush1.bf16.msra.mxu0 %v480
    %680 = vmatprep.subr.bf16.mxu0 %v479
    %681 = vmatpush1.bf16.msra.mxu0 %v478
    %682 = vmatprep.subr.bf16.mxu0 %v477
    %683 = vmatpush1.bf16.msra.mxu0 %v476
    %684 = vmatprep.subr.bf16.mxu0 %v475
    %685 = vmatpush1.bf16.msra.mxu0 %v474
    %686 = vmatprep.subr.bf16.mxu0 %v473
    %687 = vmatpush1.bf16.msra.mxu0 %v472
    %688 = vmatprep.subr.bf16.mxu0 %v503
    %689 = vmatpush2.bf16.msra.mxu0 %v502
    %690 = vmatprep.subr.bf16.mxu0 %v501
    %691 = vmatpush2.bf16.msra.mxu0 %v500
    %692 = vmatprep.subr.bf16.mxu0 %v499
    %693 = vmatpush2.bf16.msra.mxu0 %v498
    %694 = vmatprep.subr.bf16.mxu0 %v497
    %695 = vmatpush2.bf16.msra.mxu0 %v496
    %696 = vmatprep.subr.bf16.mxu0 %v495
    %697 = vmatpush2.bf16.msra.mxu0 %v494
    %698 = vmatprep.subr.bf16.mxu0 %v493
    %699 = vmatpush2.bf16.msra.mxu0 %v492
    %700 = vmatprep.subr.bf16.mxu0 %v491
    %701 = vmatpush2.bf16.msra.mxu0 %v490
    %702 = vmatprep.subr.bf16.mxu0 %v489
    %703 = vmatpush2.bf16.msra.mxu0 %v488
    %704 = vmatprep.mubr.bf16.mxu0 %v62
    %705 = vmatmul.mubr.bf16.gmra.mxu0 %v61
    %v706 = vpop.f32.mrf.mxu0
    %v707 = vadd.f32 %v171, %v706
    %v708 = vpop.f32.mrf.mxu0
    %v709 = vadd.f32 %v175, %v708
    %v710 = vpop.f32.mrf.mxu0
    %v711 = vadd.f32 %v171, %v710
    %v712 = vpop.f32.mrf.mxu0
    %v713 = vadd.f32 %v175, %v712
    %714 = vdwg.mxu0
    %715 = vmatprep.subr.bf16.mxu0 %v519
    %716 = vmatpush1.bf16.msra.mxu0 %v518
    %717 = vmatprep.subr.bf16.mxu0 %v517
    %718 = vmatpush1.bf16.msra.mxu0 %v516
    %719 = vmatprep.subr.bf16.mxu0 %v515
    %720 = vmatpush1.bf16.msra.mxu0 %v514
    %721 = vmatprep.subr.bf16.mxu0 %v513
    %722 = vmatpush1.bf16.msra.mxu0 %v512
    %723 = vmatprep.subr.bf16.mxu0 %v511
    %724 = vmatpush1.bf16.msra.mxu0 %v510
    %725 = vmatprep.subr.bf16.mxu0 %v509
    %726 = vmatpush1.bf16.msra.mxu0 %v508
    %727 = vmatprep.subr.bf16.mxu0 %v507
    %728 = vmatpush1.bf16.msra.mxu0 %v506
    %729 = vmatprep.subr.bf16.mxu0 %v505
    %730 = vmatpush1.bf16.msra.mxu0 %v504
    %731 = vmatprep.subr.bf16.mxu0 %v535
    %732 = vmatpush2.bf16.msra.mxu0 %v534
    %733 = vmatprep.subr.bf16.mxu0 %v533
    %734 = vmatpush2.bf16.msra.mxu0 %v532
    %735 = vmatprep.subr.bf16.mxu0 %v531
    %736 = vmatpush2.bf16.msra.mxu0 %v530
    %737 = vmatprep.subr.bf16.mxu0 %v529
    %738 = vmatpush2.bf16.msra.mxu0 %v528
    %739 = vmatprep.subr.bf16.mxu0 %v527
    %740 = vmatpush2.bf16.msra.mxu0 %v526
    %741 = vmatprep.subr.bf16.mxu0 %v525
    %742 = vmatpush2.bf16.msra.mxu0 %v524
    %743 = vmatprep.subr.bf16.mxu0 %v523
    %744 = vmatpush2.bf16.msra.mxu0 %v522
    %745 = vmatprep.subr.bf16.mxu0 %v521
    %746 = vmatpush2.bf16.msra.mxu0 %v520
    %747 = vmatprep.mubr.bf16.mxu0 %v64
    %748 = vmatmul.mubr.bf16.gmra.mxu0 %v63
    %v749 = vpop.f32.mrf.mxu0
    %v750 = vadd.f32 %v707, %v749
    %v751 = vpop.f32.mrf.mxu0
    %v752 = vadd.f32 %v709, %v751
    %v753 = vpop.f32.mrf.mxu0
    %v754 = vadd.f32 %v711, %v753
    %v755 = vpop.f32.mrf.mxu0
    %v756 = vadd.f32 %v713, %v755
    %757 = vdwg.mxu0
    %758 = vmatprep.subr.bf16.mxu0 %v551
    %759 = vmatpush1.bf16.msra.mxu0 %v550
    %760 = vmatprep.subr.bf16.mxu0 %v549
    %761 = vmatpush1.bf16.msra.mxu0 %v548
    %762 = vmatprep.subr.bf16.mxu0 %v547
    %763 = vmatpush1.bf16.msra.mxu0 %v546
    %764 = vmatprep.subr.bf16.mxu0 %v545
    %765 = vmatpush1.bf16.msra.mxu0 %v544
    %766 = vmatprep.subr.bf16.mxu0 %v543
    %767 = vmatpush1.bf16.msra.mxu0 %v542
    %768 = vmatprep.subr.bf16.mxu0 %v541
    %769 = vmatpush1.bf16.msra.mxu0 %v540
    %770 = vmatprep.subr.bf16.mxu0 %v539
    %771 = vmatpush1.bf16.msra.mxu0 %v538
    %772 = vmatprep.subr.bf16.mxu0 %v537
    %773 = vmatpush1.bf16.msra.mxu0 %v536
    %774 = vmatprep.subr.bf16.mxu0 %v567
    %775 = vmatpush2.bf16.msra.mxu0 %v566
    %776 = vmatprep.subr.bf16.mxu0 %v565
    %777 = vmatpush2.bf16.msra.mxu0 %v564
    %778 = vmatprep.subr.bf16.mxu0 %v563
    %779 = vmatpush2.bf16.msra.mxu0 %v562
    %780 = vmatprep.subr.bf16.mxu0 %v561
    %781 = vmatpush2.bf16.msra.mxu0 %v560
    %782 = vmatprep.subr.bf16.mxu0 %v559
    %783 = vmatpush2.bf16.msra.mxu0 %v558
    %784 = vmatprep.subr.bf16.mxu0 %v557
    %785 = vmatpush2.bf16.msra.mxu0 %v556
    %786 = vmatprep.subr.bf16.mxu0 %v555
    %787 = vmatpush2.bf16.msra.mxu0 %v554
    %788 = vmatprep.subr.bf16.mxu0 %v553
    %789 = vmatpush2.bf16.msra.mxu0 %v552
    %790 = vmatprep.mubr.bf16.mxu0 %v66
    %791 = vmatmul.mubr.bf16.gmra.mxu0 %v65
    %v792 = vpop.f32.mrf.mxu0
    %v793 = vadd.f32 %v750, %v792
    %v794 = vpop.f32.mrf.mxu0
    %v795 = vadd.f32 %v752, %v794
    %v796 = vpop.f32.mrf.mxu0
    %v797 = vadd.f32 %v754, %v796
    %v798 = vpop.f32.mrf.mxu0
    %v799 = vadd.f32 %v756, %v798
    %800 = vdwg.mxu0
    %801 = vmatprep.subr.bf16.mxu0 0
    %802 = vmatpush1.bf16.msra.mxu0 0
    %803 = vmatprep.subr.bf16.mxu0 0
    %804 = vmatpush1.bf16.msra.mxu0 0
    %805 = vmatprep.subr.bf16.mxu0 0
    %806 = vmatpush1.bf16.msra.mxu0 0
    %807 = vmatprep.subr.bf16.mxu0 0
    %808 = vmatpush1.bf16.msra.mxu0 0
    %809 = vmatprep.subr.bf16.mxu0 0
    %810 = vmatpush1.bf16.msra.mxu0 0
    %811 = vmatprep.subr.bf16.mxu0 0
    %812 = vmatpush1.bf16.msra.mxu0 0
    %813 = vmatprep.subr.bf16.mxu0 0
    %814 = vmatpush1.bf16.msra.mxu0 0
    %815 = vmatprep.subr.bf16.mxu0 %v569
    %816 = vmatpush1.bf16.msra.mxu0 %v568
    %817 = vmatprep.subr.bf16.mxu0 0
    %818 = vmatpush2.bf16.msra.mxu0 0
    %819 = vmatprep.subr.bf16.mxu0 0
    %820 = vmatpush2.bf16.msra.mxu0 0
    %821 = vmatprep.subr.bf16.mxu0 0
    %822 = vmatpush2.bf16.msra.mxu0 0
    %823 = vmatprep.subr.bf16.mxu0 0
    %824 = vmatpush2.bf16.msra.mxu0 0
    %825 = vmatprep.subr.bf16.mxu0 0
    %826 = vmatpush2.bf16.msra.mxu0 0
    %827 = vmatprep.subr.bf16.mxu0 0
    %828 = vmatpush2.bf16.msra.mxu0 0
    %829 = vmatprep.subr.bf16.mxu0 0
    %830 = vmatpush2.bf16.msra.mxu0 0
    %831 = vmatprep.subr.bf16.mxu0 0
    %832 = vmatpush2.bf16.msra.mxu0 0
    %833 = vmatprep.mubr.bf16.mxu0 0
    %834 = vmatmul.mubr.bf16.gmra.mxu0 %v670
    %v835 = vpop.f32.mrf.mxu0
    %v836 = vadd.f32 %v793, %v835
    %v837 = vpop.f32.mrf.mxu0
    %v838 = vadd.f32 %v795, %v837
    %v839 = vpop.f32.mrf.mxu0
    %v840 = vadd.f32 %v797, %v839
    %v841 = vpop.f32.mrf.mxu0
    %v842 = vadd.f32 %v799, %v841
    %843 = vdwg.mxu0
    %v844 = vmax.f32 %v836, 0.0
    %v845 = vmax.f32 %v838, 0.0
    %v846 = vmax.f32 %v840, 0.0
    %v847 = vmax.f32 %v842, 0.0
    %v848 = vpack.c.bf16 %v846, %v844
    %v849 = vpack.c.bf16 %v847, %v845
    %v850 = vld [vmem:[%s3] sm:$0xff]
    %v851 = vld [vmem:[%s3 + $0x8] sm:$0xff]
    %v852 = vld [vmem:[%s3 + $0x10] sm:$0xff]
    %v853 = vld [vmem:[%s3 + $0x18] sm:$0xff]
    %v854 = vld [vmem:[%s3 + $0x20] sm:$0xff]
    %v855 = vld [vmem:[%s3 + $0x28] sm:$0xff]
    %v856 = vld [vmem:[%s3 + $0x30] sm:$0xff]
    %v857 = vld [vmem:[%s3 + $0x38] sm:$0xff]
    %v858 = vld [vmem:[%s3 + $0x40] sm:$0xff]
    %v859 = vld [vmem:[%s3 + $0x48] sm:$0xff]
    %v860 = vld [vmem:[%s3 + $0x50] sm:$0xff]
    %v861 = vld [vmem:[%s3 + $0x58] sm:$0xff]
    %v862 = vld [vmem:[%s3 + $0x60] sm:$0xff]
    %v863 = vld [vmem:[%s3 + $0x68] sm:$0xff]
    %v864 = vld [vmem:[%s3 + $0x70] sm:$0xff]
    %v865 = vld [vmem:[%s3 + $0x78] sm:$0xff]
    %v866 = vld [vmem:[%s3 + $0x80] sm:$0xff]
    %v867 = vld [vmem:[%s3 + $0x88] sm:$0xff]
    %v868 = vld [vmem:[%s3 + $0x90] sm:$0xff]
    %v869 = vld [vmem:[%s3 + $0x98] sm:$0xff]
    %v870 = vld [vmem:[%s3 + $0xa0] sm:$0xff]
    %v871 = vld [vmem:[%s3 + $0xa8] sm:$0xff]
    %v872 = vld [vmem:[%s3 + $0xb0] sm:$0xff]
    %v873 = vld [vmem:[%s3 + $0xb8] sm:$0xff]
    %v874 = vld [vmem:[%s3 + $0xc0] sm:$0xff]
    %v875 = vld [vmem:[%s3 + $0xc8] sm:$0xff]
    %v876 = vld [vmem:[%s3 + $0xd0] sm:$0xff]
    %v877 = vld [vmem:[%s3 + $0xd8] sm:$0xff]
    %v878 = vld [vmem:[%s3 + $0xe0] sm:$0xff]
    %v879 = vld [vmem:[%s3 + $0xe8] sm:$0xff]
    %v880 = vld [vmem:[%s3 + $0xf0] sm:$0xff]
    %v881 = vld [vmem:[%s3 + $0xf8] sm:$0xff]
    %v882 = vld [vmem:[%s4] sm:$0x3]
    %v884 = vlaneseq
    %v885 = vshrl.u32 %v884, 7
    %v886 = vsub.s32 0, %v885
    %v887 = vrot.slane %v882, %v886
    %v888 = vlaneseq
    %v889 = vshrl.u32 %v888, 7
    %v890 = vsub.s32 1, %v889
    %v891 = vrot.slane %v882, %v890
    %v926 = vunpack.c.l.b16 %v850
    %v927 = vunpack.c.h.b16 %v850
    %v928 = vunpack.c.l.b16 %v851
    %v929 = vunpack.c.h.b16 %v851
    %v930 = vunpack.c.l.b16 %v852
    %v931 = vunpack.c.h.b16 %v852
    %v932 = vunpack.c.l.b16 %v853
    %v933 = vunpack.c.h.b16 %v853
    %v934 = vunpack.c.l.b16 %v854
    %v935 = vunpack.c.h.b16 %v854
    %v936 = vunpack.c.l.b16 %v855
    %v937 = vunpack.c.h.b16 %v855
    %v938 = vunpack.c.l.b16 %v856
    %v939 = vunpack.c.h.b16 %v856
    %v940 = vunpack.c.l.b16 %v857
    %v941 = vunpack.c.h.b16 %v857
    %v942 = vunpack.c.l.b16 %v858
    %v943 = vunpack.c.h.b16 %v858
    %v944 = vunpack.c.l.b16 %v859
    %v945 = vunpack.c.h.b16 %v859
    %v946 = vunpack.c.l.b16 %v860
    %v947 = vunpack.c.h.b16 %v860
    %v948 = vunpack.c.l.b16 %v861
    %v949 = vunpack.c.h.b16 %v861
    %v950 = vunpack.c.l.b16 %v862
    %v951 = vunpack.c.h.b16 %v862
    %v952 = vunpack.c.l.b16 %v863
    %v953 = vunpack.c.h.b16 %v863
    %v954 = vunpack.c.l.b16 %v864
    %v955 = vunpack.c.h.b16 %v864
    %v956 = vunpack.c.l.b16 %v865
    %v957 = vunpack.c.h.b16 %v865
    %v958 = vunpack.c.l.b16 %v866
    %v959 = vunpack.c.h.b16 %v866
    %v960 = vunpack.c.l.b16 %v867
    %v961 = vunpack.c.h.b16 %v867
    %v962 = vunpack.c.l.b16 %v868
    %v963 = vunpack.c.h.b16 %v868
    %v964 = vunpack.c.l.b16 %v869
    %v965 = vunpack.c.h.b16 %v869
    %v966 = vunpack.c.l.b16 %v870
    %v967 = vunpack.c.h.b16 %v870
    %v968 = vunpack.c.l.b16 %v871
    %v969 = vunpack.c.h.b16 %v871
    %v970 = vunpack.c.l.b16 %v872
    %v971 = vunpack.c.h.b16 %v872
    %v972 = vunpack.c.l.b16 %v873
    %v973 = vunpack.c.h.b16 %v873
    %v974 = vunpack.c.l.b16 %v874
    %v975 = vunpack.c.h.b16 %v874
    %v976 = vunpack.c.l.b16 %v875
    %v977 = vunpack.c.h.b16 %v875
    %v978 = vunpack.c.l.b16 %v876
    %v979 = vunpack.c.h.b16 %v876
    %v980 = vunpack.c.l.b16 %v877
    %v981 = vunpack.c.h.b16 %v877
    %v982 = vunpack.c.l.b16 %v878
    %v983 = vunpack.c.h.b16 %v878
    %v984 = vunpack.c.l.b16 %v879
    %v985 = vunpack.c.h.b16 %v879
    %v986 = vunpack.c.l.b16 %v880
    %v987 = vunpack.c.h.b16 %v880
    %v988 = vunpack.c.l.b16 %v881
    %v989 = vunpack.c.h.b16 %v881
    %v990 = vpack.c.b16 %v928, %v926
    %v991 = vpack.c.b16 %v929, %v927
    %v992 = vpack.c.b16 %v932, %v930
    %v993 = vpack.c.b16 %v933, %v931
    %v994 = vpack.c.b16 %v936, %v934
    %v995 = vpack.c.b16 %v937, %v935
    %v996 = vpack.c.b16 %v940, %v938
    %v997 = vpack.c.b16 %v941, %v939
    %v998 = vpack.c.b16 %v944, %v942
    %v999 = vpack.c.b16 %v945, %v943
    %v1000 = vpack.c.b16 %v948, %v946
    %v1001 = vpack.c.b16 %v949, %v947
    %v1002 = vpack.c.b16 %v952, %v950
    %v1003 = vpack.c.b16 %v953, %v951
    %v1004 = vpack.c.b16 %v956, %v954
    %v1005 = vpack.c.b16 %v957, %v955
    %v1006 = vpack.c.b16 %v960, %v958
    %v1007 = vpack.c.b16 %v961, %v959
    %v1008 = vpack.c.b16 %v964, %v962
    %v1009 = vpack.c.b16 %v965, %v963
    %v1010 = vpack.c.b16 %v968, %v966
    %v1011 = vpack.c.b16 %v969, %v967
    %v1012 = vpack.c.b16 %v972, %v970
    %v1013 = vpack.c.b16 %v973, %v971
    %v1014 = vpack.c.b16 %v976, %v974
    %v1015 = vpack.c.b16 %v977, %v975
    %v1016 = vpack.c.b16 %v980, %v978
    %v1017 = vpack.c.b16 %v981, %v979
    %v1018 = vpack.c.b16 %v984, %v982
    %v1019 = vpack.c.b16 %v985, %v983
    %v1020 = vpack.c.b16 %v988, %v986
    %v1021 = vpack.c.b16 %v989, %v987
    %1054 = vmatprep.subr.bf16.mxu0 %v1005
    %1055 = vmatpush1.bf16.msra.mxu0 %v1004
    %1056 = vmatprep.subr.bf16.mxu0 %v1003
    %1057 = vmatpush1.bf16.msra.mxu0 %v1002
    %1058 = vmatprep.subr.bf16.mxu0 %v1001
    %1059 = vmatpush1.bf16.msra.mxu0 %v1000
    %1060 = vmatprep.subr.bf16.mxu0 %v999
    %1061 = vmatpush1.bf16.msra.mxu0 %v998
    %1062 = vmatprep.subr.bf16.mxu0 %v997
    %1063 = vmatpush1.bf16.msra.mxu0 %v996
    %1064 = vmatprep.subr.bf16.mxu0 %v995
    %1065 = vmatpush1.bf16.msra.mxu0 %v994
    %1066 = vmatprep.subr.bf16.mxu0 %v993
    %1067 = vmatpush1.bf16.msra.mxu0 %v992
    %1068 = vmatprep.subr.bf16.mxu0 %v991
    %1069 = vmatpush1.bf16.msra.mxu0 %v990
    %1070 = vmatprep.subr.bf16.mxu0 %v1021
    %1071 = vmatpush2.bf16.msra.mxu0 %v1020
    %1072 = vmatprep.subr.bf16.mxu0 %v1019
    %1073 = vmatpush2.bf16.msra.mxu0 %v1018
    %1074 = vmatprep.subr.bf16.mxu0 %v1017
    %1075 = vmatpush2.bf16.msra.mxu0 %v1016
    %1076 = vmatprep.subr.bf16.mxu0 %v1015
    %1077 = vmatpush2.bf16.msra.mxu0 %v1014
    %1078 = vmatprep.subr.bf16.mxu0 %v1013
    %1079 = vmatpush2.bf16.msra.mxu0 %v1012
    %1080 = vmatprep.subr.bf16.mxu0 %v1011
    %1081 = vmatpush2.bf16.msra.mxu0 %v1010
    %1082 = vmatprep.subr.bf16.mxu0 %v1009
    %1083 = vmatpush2.bf16.msra.mxu0 %v1008
    %1084 = vmatprep.subr.bf16.mxu0 %v1007
    %1085 = vmatpush2.bf16.msra.mxu0 %v1006
    %1086 = vmatprep.mubr.bf16.mxu0 %v849
    %1087 = vmatmul.mubr.bf16.gmra.mxu0 %v848
    %v1088 = vpop.f32.mrf.mxu0
    %v1089 = vadd.f32 %v887, %v1088
    %v1090 = vpop.f32.mrf.mxu0
    %v1091 = vadd.f32 %v891, %v1090
    %v1092 = vpop.f32.mrf.mxu0
    %v1093 = vadd.f32 %v887, %v1092
    %v1094 = vpop.f32.mrf.mxu0
    %v1095 = vadd.f32 %v891, %v1094
    %1096 = vdwg.mxu0
    %v1097 = vmax.f32 %v1089, 0.0
    %v1098 = vmax.f32 %v1091, 0.0
    %v1099 = vmax.f32 %v1093, 0.0
    %v1100 = vmax.f32 %v1095, 0.0
    %v1101 = vpack.c.bf16 %v1099, %v1097
    %v1102 = vpack.c.bf16 %v1100, %v1098
    %v1103 = vld [vmem:[%s5] sm:$0xf]
    %v1104 = vld [vmem:[%s5 + $0x4] sm:$0xf]
    %v1105 = vld [vmem:[%s5 + $0x8] sm:$0xf]
    %v1106 = vld [vmem:[%s5 + $0xc] sm:$0xf]
    %v1107 = vld [vmem:[%s5 + $0x10] sm:$0xf]
    %v1108 = vld [vmem:[%s5 + $0x14] sm:$0xf]
    %v1109 = vld [vmem:[%s5 + $0x18] sm:$0xf]
    %v1110 = vld [vmem:[%s5 + $0x1c] sm:$0xf]
    %v1111 = vld [vmem:[%s5 + $0x20] sm:$0xf]
    %v1112 = vld [vmem:[%s5 + $0x24] sm:$0xf]
    %v1113 = vld [vmem:[%s5 + $0x28] sm:$0xf]
    %v1114 = vld [vmem:[%s5 + $0x2c] sm:$0xf]
    %v1115 = vld [vmem:[%s5 + $0x30] sm:$0xf]
    %v1116 = vld [vmem:[%s5 + $0x34] sm:$0xf]
    %v1117 = vld [vmem:[%s5 + $0x38] sm:$0xf]
    %v1118 = vld [vmem:[%s5 + $0x3c] sm:$0xf]
    %v1119 = vld [vmem:[%s5 + $0x40] sm:$0xf]
    %v1120 = vld [vmem:[%s5 + $0x44] sm:$0xf]
    %v1121 = vld [vmem:[%s5 + $0x48] sm:$0xf]
    %v1122 = vld [vmem:[%s5 + $0x4c] sm:$0xf]
    %v1123 = vld [vmem:[%s5 + $0x50] sm:$0xf]
    %v1124 = vld [vmem:[%s5 + $0x54] sm:$0xf]
    %v1125 = vld [vmem:[%s5 + $0x58] sm:$0xf]
    %v1126 = vld [vmem:[%s5 + $0x5c] sm:$0xf]
    %v1127 = vld [vmem:[%s5 + $0x60] sm:$0xf]
    %v1128 = vld [vmem:[%s5 + $0x64] sm:$0xf]
    %v1129 = vld [vmem:[%s5 + $0x68] sm:$0xf]
    %v1130 = vld [vmem:[%s5 + $0x6c] sm:$0xf]
    %v1131 = vld [vmem:[%s5 + $0x70] sm:$0xf]
    %v1132 = vld [vmem:[%s5 + $0x74] sm:$0xf]
    %v1133 = vld [vmem:[%s5 + $0x78] sm:$0xf]
    %v1134 = vld [vmem:[%s5 + $0x7c] sm:$0xf]
    %v1135 = vld [vmem:[%s6] sm:$0x1]
    %v1137 = vlaneseq
    %v1138 = vshrl.u32 %v1137, 7
    %v1139 = vsub.s32 0, %v1138
    %v1140 = vrot.slane %v1135, %v1139
    %v1174 = vunpack.c.l.b16 %v1103
    %v1175 = vunpack.c.l.b16 %v1104
    %v1176 = vunpack.c.l.b16 %v1105
    %v1177 = vunpack.c.l.b16 %v1106
    %v1178 = vunpack.c.l.b16 %v1107
    %v1179 = vunpack.c.l.b16 %v1108
    %v1180 = vunpack.c.l.b16 %v1109
    %v1181 = vunpack.c.l.b16 %v1110
    %v1182 = vunpack.c.l.b16 %v1111
    %v1183 = vunpack.c.l.b16 %v1112
    %v1184 = vunpack.c.l.b16 %v1113
    %v1185 = vunpack.c.l.b16 %v1114
    %v1186 = vunpack.c.l.b16 %v1115
    %v1187 = vunpack.c.l.b16 %v1116
    %v1188 = vunpack.c.l.b16 %v1117
    %v1189 = vunpack.c.l.b16 %v1118
    %v1190 = vunpack.c.l.b16 %v1119
    %v1191 = vunpack.c.l.b16 %v1120
    %v1192 = vunpack.c.l.b16 %v1121
    %v1193 = vunpack.c.l.b16 %v1122
    %v1194 = vunpack.c.l.b16 %v1123
    %v1195 = vunpack.c.l.b16 %v1124
    %v1196 = vunpack.c.l.b16 %v1125
    %v1197 = vunpack.c.l.b16 %v1126
    %v1198 = vunpack.c.l.b16 %v1127
    %v1199 = vunpack.c.l.b16 %v1128
    %v1200 = vunpack.c.l.b16 %v1129
    %v1201 = vunpack.c.l.b16 %v1130
    %v1202 = vunpack.c.l.b16 %v1131
    %v1203 = vunpack.c.l.b16 %v1132
    %v1204 = vunpack.c.l.b16 %v1133
    %v1205 = vunpack.c.l.b16 %v1134
    %v1206 = vpack.c.b16 %v1175, %v1174
    %v1207 = vpack.c.b16 %v1177, %v1176
    %v1208 = vpack.c.b16 %v1179, %v1178
    %v1209 = vpack.c.b16 %v1181, %v1180
    %v1210 = vpack.c.b16 %v1183, %v1182
    %v1211 = vpack.c.b16 %v1185, %v1184
    %v1212 = vpack.c.b16 %v1187, %v1186
    %v1213 = vpack.c.b16 %v1189, %v1188
    %v1214 = vpack.c.b16 %v1191, %v1190
    %v1215 = vpack.c.b16 %v1193, %v1192
    %v1216 = vpack.c.b16 %v1195, %v1194
    %v1217 = vpack.c.b16 %v1197, %v1196
    %v1218 = vpack.c.b16 %v1199, %v1198
    %v1219 = vpack.c.b16 %v1201, %v1200
    %v1220 = vpack.c.b16 %v1203, %v1202
    %v1221 = vpack.c.b16 %v1205, %v1204
    %1238 = vmatprep.subr.bf16.mxu0 0
    %1239 = vmatpush1.bf16.msra.mxu0 %v1213
    %1240 = vmatprep.subr.bf16.mxu0 0
    %1241 = vmatpush1.bf16.msra.mxu0 %v1212
    %1242 = vmatprep.subr.bf16.mxu0 0
    %1243 = vmatpush1.bf16.msra.mxu0 %v1211
    %1244 = vmatprep.subr.bf16.mxu0 0
    %1245 = vmatpush1.bf16.msra.mxu0 %v1210
    %1246 = vmatprep.subr.bf16.mxu0 0
    %1247 = vmatpush1.bf16.msra.mxu0 %v1209
    %1248 = vmatprep.subr.bf16.mxu0 0
    %1249 = vmatpush1.bf16.msra.mxu0 %v1208
    %1250 = vmatprep.subr.bf16.mxu0 0
    %1251 = vmatpush1.bf16.msra.mxu0 %v1207
    %1252 = vmatprep.subr.bf16.mxu0 0
    %1253 = vmatpush1.bf16.msra.mxu0 %v1206
    %1254 = vmatprep.subr.bf16.mxu0 0
    %1255 = vmatpush2.bf16.msra.mxu0 %v1221
    %1256 = vmatprep.subr.bf16.mxu0 0
    %1257 = vmatpush2.bf16.msra.mxu0 %v1220
    %1258 = vmatprep.subr.bf16.mxu0 0
    %1259 = vmatpush2.bf16.msra.mxu0 %v1219
    %1260 = vmatprep.subr.bf16.mxu0 0
    %1261 = vmatpush2.bf16.msra.mxu0 %v1218
    %1262 = vmatprep.subr.bf16.mxu0 0
    %1263 = vmatpush2.bf16.msra.mxu0 %v1217
    %1264 = vmatprep.subr.bf16.mxu0 0
    %1265 = vmatpush2.bf16.msra.mxu0 %v1216
    %1266 = vmatprep.subr.bf16.mxu0 0
    %1267 = vmatpush2.bf16.msra.mxu0 %v1215
    %1268 = vmatprep.subr.bf16.mxu0 0
    %1269 = vmatpush2.bf16.msra.mxu0 %v1214
    %1270 = vmatprep.mubr.bf16.mxu0 %v1102
    %1271 = vmatmul.mubr.bf16.gmra.mxu0 %v1101
    %v1272 = vpop.f32.mrf.mxu0
    %v1273 = vadd.f32 %v1140, %v1272
    %v1274 = vpop.f32.mrf.mxu0
    %v1275 = vpop.f32.mrf.mxu0
    %v1276 = vadd.f32 %v1140, %v1275
    %v1277 = vpop.f32.mrf.mxu0
    %1278 = vdwg.mxu0
    %v1279 = vmax.f32 %v1273, 0.0
    %v1280 = vmax.f32 %v1276, 0.0
    %v1281 = vpack.c.bf16 %v1280, %v1279
    %v1282 = vld [vmem:[%s7] sm:$0xf]
    %v1283 = vld [vmem:[%s7 + $0x4] sm:$0xf]
    %v1284 = vld [vmem:[%s7 + $0x8] sm:$0xf]
    %v1285 = vld [vmem:[%s7 + $0xc] sm:$0xf]
    %v1286 = vld [vmem:[%s7 + $0x10] sm:$0xf]
    %v1287 = vld [vmem:[%s7 + $0x14] sm:$0xf]
    %v1288 = vld [vmem:[%s7 + $0x18] sm:$0xf]
    %v1289 = vld [vmem:[%s7 + $0x1c] sm:$0xf]
    %v1290 = vld [vmem:[%s8] sm:$0x1]
    %v1292 = vlaneseq
    %v1293 = vshrl.u32 %v1292, 7
    %v1294 = vsub.s32 0, %v1293
    %v1295 = vrot.slane %v1290, %v1294
    %v1305 = vunpack.c.l.b16 %v1282
    %v1306 = vunpack.c.l.b16 %v1283
    %v1307 = vunpack.c.l.b16 %v1284
    %v1308 = vunpack.c.l.b16 %v1285
    %v1309 = vunpack.c.l.b16 %v1286
    %v1310 = vunpack.c.l.b16 %v1287
    %v1311 = vunpack.c.l.b16 %v1288
    %v1312 = vunpack.c.l.b16 %v1289
    %v1313 = vpack.c.b16 %v1306, %v1305
    %v1314 = vpack.c.b16 %v1308, %v1307
    %v1315 = vpack.c.b16 %v1310, %v1309
    %v1316 = vpack.c.b16 %v1312, %v1311
    %vm1321 = vcmask 523264
    %v1323 = vsel %vm1321, %v1281, 0
    %1325 = vmatprep.subr.bf16.mxu0 0
    %1326 = vmatpush1.bf16.msra.mxu0 0
    %1327 = vmatprep.subr.bf16.mxu0 0
    %1328 = vmatpush1.bf16.msra.mxu0 0
    %1329 = vmatprep.subr.bf16.mxu0 0
    %1330 = vmatpush1.bf16.msra.mxu0 0
    %1331 = vmatprep.subr.bf16.mxu0 0
    %1332 = vmatpush1.bf16.msra.mxu0 0
    %1333 = vmatprep.subr.bf16.mxu0 0
    %1334 = vmatpush1.bf16.msra.mxu0 %v1316
    %1335 = vmatprep.subr.bf16.mxu0 0
    %1336 = vmatpush1.bf16.msra.mxu0 %v1315
    %1337 = vmatprep.subr.bf16.mxu0 0
    %1338 = vmatpush1.bf16.msra.mxu0 %v1314
    %1339 = vmatprep.subr.bf16.mxu0 0
    %1340 = vmatpush1.bf16.msra.mxu0 %v1313
    %1341 = vmatprep.subr.bf16.mxu0 0
    %1342 = vmatpush2.bf16.msra.mxu0 0
    %1343 = vmatprep.subr.bf16.mxu0 0
    %1344 = vmatpush2.bf16.msra.mxu0 0
    %1345 = vmatprep.subr.bf16.mxu0 0
    %1346 = vmatpush2.bf16.msra.mxu0 0
    %1347 = vmatprep.subr.bf16.mxu0 0
    %1348 = vmatpush2.bf16.msra.mxu0 0
    %1349 = vmatprep.subr.bf16.mxu0 0
    %1350 = vmatpush2.bf16.msra.mxu0 0
    %1351 = vmatprep.subr.bf16.mxu0 0
    %1352 = vmatpush2.bf16.msra.mxu0 0
    %1353 = vmatprep.subr.bf16.mxu0 0
    %1354 = vmatpush2.bf16.msra.mxu0 0
    %1355 = vmatprep.subr.bf16.mxu0 0
    %1356 = vmatpush2.bf16.msra.mxu0 0
    %1357 = vmatprep.mubr.bf16.mxu0 0
    %1358 = vmatmul.mubr.bf16.gmra.mxu0 %v1323
    %v1359 = vpop.f32.mrf.mxu0
    %v1360 = vadd.f32 %v1295, %v1359
    %v1361 = vpop.f32.mrf.mxu0
    %v1362 = vpop.f32.mrf.mxu0
    %v1363 = vadd.f32 %v1295, %v1362
    %v1364 = vpop.f32.mrf.mxu0
    %1365 = vdwg.mxu0
    %v1366 = vlaneseq
    %v1367 = vand.u32 %v1366, 127
    %vm1368 = vcmp.lt.s32.totalorder %v1367, 10
    %v1369 = vsel %vm1368, %v1360, -1e+30
    %v1370 = vsel %vm1368, %v1363, -1e+30
    %1371 = vmax.xlane.f32.xlu0 %v1369
    %v1372 = vpop.xlane.xlu0 %1371
    %1373 = vmax.xlane.f32.xlu0 %v1370
    %v1374 = vpop.xlane.xlu0 %1373
    %v1375 = vsub.f32 %v1369, %v1372
    %v1376 = vsub.f32 %v1370, %v1374
    %v1377 = vmul.f32 %v1375, 1.442695
    %v1378 = vpow.pop %v1377
    %v1379 = vmul.f32 %v1376, 1.442695
    %v1380 = vpow.pop %v1379
    %1381 = vadd.xlane.f32.xlu0 %v1378
    %v1382 = vpop.xlane.xlu0 %1381
    %1383 = vadd.xlane.f32.xlu0 %v1380
    %v1384 = vpop.xlane.xlu0 %1383
    %v1385 = vlog2.pop %v1382
    %v1386 = vmul.f32 %v1385, 0.6931472
    %v1387 = vlog2.pop %v1384
    %v1388 = vmul.f32 %v1387, 0.6931472
    %v1389 = vsub.f32 %v1375, %v1386
    %v1390 = vsub.f32 %v1376, %v1388
    %v1391 = vpack.c.bf16 %v1390, %v1389
    %v1393 = vunpack.c.l.b16 %v1391
    %v1394 = vunpack.c.h.b16 %v1391
    %v1395 = vpack.c.b16 %v1393, %v1393
    %v1396 = vpack.c.b16 %v1394, %v1394
    %1399 = vst [vmem:[%s9] sm:$0xf] %v1395
    %1400 = vst [vmem:[%s9 + $0x4] sm:$0xf] %v1396
    // Predicated region
    $region42: #{mlp_forward.1} parent=1 // pred_check
      _
    $region43: #{mlp_forward.1} parent=1 // pred_check_branch
      %1402 = sbr.rel (0) target = $region45
    $region44: #{mlp_forward.1} parent=1 // pred_region
      _
    $region45: #{mlp_forward.1} parent=1 // pred_fallthru
      _
    // Predicated region
    $region46: #{mlp_forward.1} parent=1 // pred_check
      _
    $region47: #{mlp_forward.1} parent=1 // pred_check_branch
      %1404 = sbr.rel (0) target = $region49
    $region48: #{mlp_forward.1} parent=1 // pred_region
      _
    $region49: #{mlp_forward.1} parent=1 // pred_fallthru
      _
    %1405 = vsyncpa [#allocation3], 1

</llo_original>
